<compile_context>
chip_gen: v7x
topology: tpu7x:2x2x1
jax: 0.10.0
libtpu: 0.0.40
codegen_flags: <defaults>
</compile_context>

<pallas_src>
import jax
import jax.numpy as jnp
from jax.experimental import pallas as pl
from jax.experimental.pallas import tpu as pltpu


def _ceil_to(x, m):
    return (x + m - 1) // m * m


def _param_offsets(obs_dim, action_dim, hidden_dim):
    """Row offsets of each segment inside the packed parameter buffer."""
    L = 2 * hidden_dim
    r_w1o = 0
    r_w1a = _ceil_to(obs_dim, 8)
    r_w2 = r_w1a + _ceil_to(action_dim, 8)
    r_w3 = r_w2 + _ceil_to(L, 8)
    r_b1 = r_w3 + _ceil_to(L, 8)
    r_b2 = r_b1 + 8
    r_b3 = r_b2 + 8
    n_rows = r_b3 + 8
    return dict(L=L, r_w1o=r_w1o, r_w1a=r_w1a, r_w2=r_w2, r_w3=r_w3,
                r_b1=r_b1, r_b2=r_b2, r_b3=r_b3, n_rows=n_rows)


def pack_double_q_params(params_q1, params_q2, obs_dim, action_dim, hidden_dim):
    """Pack both Q-nets into one f32 (rows, 2H) buffer (done once, amortized).

    Row layout (all segment starts 8-aligned):
      [ W1_obs | W1_act | W2 block-diag | W3 (lanes 0/1) | b1 | b2 | b3 ]
    Weights are stored (in_features, out_features), i.e. PyTorch's W.T, so the
    kernel computes x @ W + b exactly like nn.Linear.
    """
    H = hidden_dim
    off = _param_offsets(obs_dim, action_dim, H)
    L = off["L"]
    w1a_, b1a_, w2a_, b2a_, w3a_, b3a_ = [jnp.asarray(t, jnp.float32) for t in params_q1]
    w1b_, b1b_, w2b_, b2b_, w3b_, b3b_ = [jnp.asarray(t, jnp.float32) for t in params_q2]

    p = jnp.zeros((off["n_rows"], L), jnp.float32)
    w1cat = jnp.concatenate([w1a_, w1b_], axis=1)                      # (in, 2H)
    p = p.at[off["r_w1o"]:off["r_w1o"] + obs_dim, :].set(w1cat[:obs_dim])
    p = p.at[off["r_w1a"]:off["r_w1a"] + action_dim, :].set(w1cat[obs_dim:])
    # layer 2: block diagonal
    p = p.at[off["r_w2"]:off["r_w2"] + H, 0:H].set(w2a_)
    p = p.at[off["r_w2"] + H:off["r_w2"] + L, H:L].set(w2b_)
    # layer 3: Q1 head in lane 0, Q2 head in lane 1
    p = p.at[off["r_w3"]:off["r_w3"] + H, 0:1].set(w3a_)
    p = p.at[off["r_w3"] + H:off["r_w3"] + L, 1:2].set(w3b_)
    # biases
    p = p.at[off["r_b1"], 0:H].set(b1a_.reshape(H))
    p = p.at[off["r_b1"], H:L].set(b1b_.reshape(H))
    p = p.at[off["r_b2"], 0:H].set(b2a_.reshape(H))
    p = p.at[off["r_b2"], H:L].set(b2b_.reshape(H))
    p = p.at[off["r_b3"], 0].set(b3a_.reshape(()))
    p = p.at[off["r_b3"], 1].set(b3b_.reshape(()))
    return p


def _make_double_q_kernel(obs_dim, action_dim, hidden_dim):
    off = _param_offsets(obs_dim, action_dim, hidden_dim)
    L = off["L"]
    r_w1a, r_w2, r_w3 = off["r_w1a"], off["r_w2"], off["r_w3"]
    r_b1, r_b2, r_b3 = off["r_b1"], off["r_b2"], off["r_b3"]

    def kernel(obs_ref, act_ref, p_ref, q_ref):
        obs = obs_ref[...]
        act = act_ref[...]
        # Layer 1: cat(obs, action) @ [W1_q1 | W1_q2] as a split matmul
        # (avoids materializing the concat outside the kernel).
        h = (jnp.dot(obs, p_ref[0:obs_dim, :], preferred_element_type=jnp.float32)
             + jnp.dot(act, p_ref[r_w1a:r_w1a + action_dim, :],
                       preferred_element_type=jnp.float32)
             + p_ref[r_b1:r_b1 + 1, :])
        h = jnp.maximum(h, 0.0)
        # Layer 2: both heads via one block-diagonal (2H, 2H) matmul.
        h = (jnp.dot(h, p_ref[r_w2:r_w2 + L, :], preferred_element_type=jnp.float32)
             + p_ref[r_b2:r_b2 + 1, :])
        h = jnp.maximum(h, 0.0)
        # Layer 3: heads live in lanes 0/1 of a (2H, 2H) block (rest zero).
        q = (jnp.dot(h, p_ref[r_w3:r_w3 + L, :], preferred_element_type=jnp.float32)
             + p_ref[r_b3:r_b3 + 1, :])
        q_ref[...] = q[:, 0:2]                       # single (B, 2) output

    return kernel


def double_q_critic_forward(obs, action, packed_params, obs_dim, action_dim,
                            hidden_dim, *, batch_block=256):
    """Returns (q1, q2), each (B, 1), matching DoubleQCritic.forward."""
    assert obs.shape[0] == action.shape[0]
    assert obs.shape[1] == obs_dim and action.shape[1] == action_dim
    obs = obs.astype(jnp.float32)
    action = action.astype(jnp.float32)
    B = obs.shape[0]
    L = 2 * hidden_dim

    # Tile the batch; keep weights resident across batch blocks.
    bb = B if B <= batch_block else batch_block
    grid = (pl.cdiv(B, bb),)

    kernel = _make_double_q_kernel(obs_dim, action_dim, hidden_dim)

    flops = 2 * B * (obs_dim * L + action_dim * L + L * L + L * L)
    bytes_accessed = 4 * (obs.size + action.size + packed_params.size + B * 2)

    q12 = pl.pallas_call(
        kernel,
        grid=grid,
        in_specs=[
            pl.BlockSpec((bb, obs_dim), lambda i: (i, 0)),
            pl.BlockSpec((bb, action_dim), lambda i: (i, 0)),
            pl.BlockSpec(packed_params.shape, lambda i: (0, 0)),  # VMEM-resident
        ],
        out_specs=pl.BlockSpec((bb, 2), lambda i: (i, 0)),
        out_shape=jax.ShapeDtypeStruct((B, 2), jnp.float32),
        compiler_params=pltpu.CompilerParams(
            dimension_semantics=("parallel",)),
        cost_estimate=pl.CostEstimate(
            flops=flops, transcendentals=0, bytes_accessed=bytes_accessed),
    )(obs, action, packed_params)

    return q12[:, 0:1], q12[:, 1:2]


def make_mlp_params(key, in_dim, hidden_dim, out_dim):
    """Deterministic synthetic init for a hidden_depth=2 MLP (w, b per layer)."""
    k1, k2, k3 = jax.random.split(key, 3)
    w1 = jax.random.normal(k1, (in_dim, hidden_dim), jnp.float32) * 0.1
    b1 = jnp.zeros((1, hidden_dim), jnp.float32)
    w2 = jax.random.normal(k2, (hidden_dim, hidden_dim), jnp.float32) * 0.1
    b2 = jnp.zeros((1, hidden_dim), jnp.float32)
    w3 = jax.random.normal(k3, (hidden_dim, out_dim), jnp.float32) * 0.1
    b3 = jnp.zeros((1, out_dim), jnp.float32)
    return (w1, b1, w2, b2, w3, b3)


def _reference_forward(obs, action, params_q1, params_q2):
    xa = jnp.concatenate([obs.astype(jnp.float32), action.astype(jnp.float32)],
                         axis=-1)

    def mlp(p):
        w1, b1, w2, b2, w3, b3 = p
        h = jnp.maximum(xa @ w1 + b1, 0.0)
        h = jnp.maximum(h @ w2 + b2, 0.0)
        return h @ w3 + b3

    return mlp(params_q1), mlp(params_q2)


if __name__ == "__main__":
    # obs_dim=24, action_dim=8 -> input dim 32, hidden_dim=32, hidden_depth=2, batch=8
    obs_dim, action_dim, hidden_dim, batch = 24, 8, 32, 8

    root = jax.random.PRNGKey(0)
    k_obs, k_act, k_q1, k_q2 = jax.random.split(root, 4)

    obs = jax.random.normal(k_obs, (batch, obs_dim), jnp.float32)
    action = jax.random.normal(k_act, (batch, action_dim), jnp.float32)

    params_q1 = make_mlp_params(k_q1, obs_dim + action_dim, hidden_dim, 1)
    params_q2 = make_mlp_params(k_q2, obs_dim + action_dim, hidden_dim, 1)

    # Pack once (amortized across training steps in real use).
    packed = pack_double_q_params(params_q1, params_q2, obs_dim, action_dim,
                                  hidden_dim)

    q1, q2 = double_q_critic_forward(obs, action, packed, obs_dim, action_dim,
                                     hidden_dim)
    q1 = jax.block_until_ready(q1)
    q2 = jax.block_until_ready(q2)

    # Correctness check against a pure-JAX reference.
    r1, r2 = _reference_forward(obs, action, params_q1, params_q2)
    assert q1.shape == (batch, 1) and q2.shape == (batch, 1)
    assert jnp.allclose(q1, r1, atol=1e-5, rtol=1e-5)
    assert jnp.allclose(q2, r2, atol=1e-5, rtol=1e-5)

    # TODO(synk): the module's `outputs` dict caching and `log()` (histogram /
    # param logging) are host-side utilities with no kernel equivalent.
    print("KERNEL_OK")
</pallas_src>

<mosaic_0001>
module attributes {stable_mosaic.version = 11 : i64} {
  func.func @kernel(%arg0: i32, %arg1: memref<8x24xf32, #tpu.memory_space<vmem>>, %arg2: memref<8x8xf32, #tpu.memory_space<vmem>>, %arg3: memref<184x64xf32, #tpu.memory_space<vmem>>, %arg4: memref<8x2xf32, #tpu.memory_space<vmem>>) attributes {dimension_semantics = [#tpu.dimension_semantics<parallel>], iteration_bounds = array<i64: 1>, scalar_prefetch = 0 : i64, scratch_operands = 0 : i64, tpu.core_type = #tpu.core_type<tc>, window_params = [{transform_indices = @transform_0, window_bounds = array<i64: 8, 24>}, {transform_indices = @transform_1, window_bounds = array<i64: 8, 8>}, {pipeline_mode = #tpu.pipeline_mode<synchronous>, transform_indices = @transform_2, window_bounds = array<i64: 184, 64>}, {transform_indices = @transform_3, window_bounds = array<i64: 8, 2>}]} {
    %c0 = arith.constant 0 : index
    %c0_0 = arith.constant 0 : index
    %0 = vector.load %arg1[%c0, %c0_0] : memref<8x24xf32, #tpu.memory_space<vmem>>, vector<8x24xf32>
    %c0_1 = arith.constant 0 : index
    %c0_2 = arith.constant 0 : index
    %1 = vector.load %arg2[%c0_1, %c0_2] : memref<8x8xf32, #tpu.memory_space<vmem>>, vector<8x8xf32>
    %c0_3 = arith.constant 0 : index
    %c0_4 = arith.constant 0 : index
    %2 = vector.load %arg3[%c0_3, %c0_4] : memref<184x64xf32, #tpu.memory_space<vmem>>, vector<24x64xf32>
    %cst = arith.constant dense<0.000000e+00> : vector<8x64xf32>
    %3 = tpu.matmul %0, %2, %cst {dimension_numbers = #tpu.dot_dimension_numbers<[1], [0], [0], [1], [0, 0, 1, 1], [], []>} : vector<8x24xf32>, vector<24x64xf32>, vector<8x64xf32> -> vector<8x64xf32>
    %c24 = arith.constant 24 : index
    %c0_5 = arith.constant 0 : index
    %4 = vector.load %arg3[%c24, %c0_5] : memref<184x64xf32, #tpu.memory_space<vmem>>, vector<8x64xf32>
    %cst_6 = arith.constant dense<0.000000e+00> : vector<8x64xf32>
    %5 = tpu.matmul %1, %4, %cst_6 {dimension_numbers = #tpu.dot_dimension_numbers<[1], [0], [0], [1], [0, 0, 1, 1], [], []>} : vector<8x8xf32>, vector<8x64xf32>, vector<8x64xf32> -> vector<8x64xf32>
    %6 = arith.addf %3, %5 : vector<8x64xf32>
    %c160 = arith.constant 160 : index
    %c0_7 = arith.constant 0 : index
    %7 = vector.load %arg3[%c160, %c0_7] : memref<184x64xf32, #tpu.memory_space<vmem>>, vector<1x64xf32>
    %8 = vector.broadcast %7 : vector<1x64xf32> to vector<8x64xf32>
    %9 = arith.addf %6, %8 : vector<8x64xf32>
    %cst_8 = arith.constant 0.000000e+00 : f32
    %10 = vector.broadcast %cst_8 : f32 to vector<8x64xf32>
    %11 = arith.maximumf %9, %10 : vector<8x64xf32>
    %c32 = arith.constant 32 : index
    %c0_9 = arith.constant 0 : index
    %12 = vector.load %arg3[%c32, %c0_9] : memref<184x64xf32, #tpu.memory_space<vmem>>, vector<64x64xf32>
    %cst_10 = arith.constant dense<0.000000e+00> : vector<8x64xf32>
    %13 = tpu.matmul %11, %12, %cst_10 {dimension_numbers = #tpu.dot_dimension_numbers<[1], [0], [0], [1], [0, 0, 1, 1], [], []>} : vector<8x64xf32>, vector<64x64xf32>, vector<8x64xf32> -> vector<8x64xf32>
    %c168 = arith.constant 168 : index
    %c0_11 = arith.constant 0 : index
    %14 = vector.load %arg3[%c168, %c0_11] : memref<184x64xf32, #tpu.memory_space<vmem>>, vector<1x64xf32>
    %15 = vector.broadcast %14 : vector<1x64xf32> to vector<8x64xf32>
    %16 = arith.addf %13, %15 : vector<8x64xf32>
    %cst_12 = arith.constant 0.000000e+00 : f32
    %17 = vector.broadcast %cst_12 : f32 to vector<8x64xf32>
    %18 = arith.maximumf %16, %17 : vector<8x64xf32>
    %c96 = arith.constant 96 : index
    %c0_13 = arith.constant 0 : index
    %19 = vector.load %arg3[%c96, %c0_13] : memref<184x64xf32, #tpu.memory_space<vmem>>, vector<64x64xf32>
    %cst_14 = arith.constant dense<0.000000e+00> : vector<8x64xf32>
    %20 = tpu.matmul %18, %19, %cst_14 {dimension_numbers = #tpu.dot_dimension_numbers<[1], [0], [0], [1], [0, 0, 1, 1], [], []>} : vector<8x64xf32>, vector<64x64xf32>, vector<8x64xf32> -> vector<8x64xf32>
    %c176 = arith.constant 176 : index
    %c0_15 = arith.constant 0 : index
    %21 = vector.load %arg3[%c176, %c0_15] : memref<184x64xf32, #tpu.memory_space<vmem>>, vector<1x64xf32>
    %22 = vector.broadcast %21 : vector<1x64xf32> to vector<8x64xf32>
    %23 = arith.addf %20, %22 : vector<8x64xf32>
    %24 = vector.extract_strided_slice %23 {offsets = [0, 0], sizes = [8, 2], strides = [1, 1]} : vector<8x64xf32> to vector<8x2xf32>
    %c0_16 = arith.constant 0 : index
    %c0_17 = arith.constant 0 : index
    %25 = vector.load %arg4[%c0_16, %c0_17] : memref<8x2xf32, #tpu.memory_space<vmem>>, vector<8x2xf32>
    tpu.vector_store %arg4[%c0_16, %c0_17], %24 {strides = array<i32>} : memref<8x2xf32, #tpu.memory_space<vmem>>, vector<8x2xf32>,
    return
  }
  func.func @transform_0(%arg0: i32) -> (i32, i32) {
    %c0_i32 = arith.constant 0 : i32
    %c0_i32_0 = arith.constant 0 : i32
    return %arg0, %c0_i32 : i32, i32
  }
  func.func @transform_1(%arg0: i32) -> (i32, i32) {
    %c0_i32 = arith.constant 0 : i32
    %c0_i32_0 = arith.constant 0 : i32
    return %arg0, %c0_i32 : i32, i32
  }
  func.func @transform_2(%arg0: i32) -> (i32, i32) {
    %c0_i32 = arith.constant 0 : i32
    %c0_i32_0 = arith.constant 0 : i32
    %c0_i32_1 = arith.constant 0 : i32
    return %c0_i32, %c0_i32_0 : i32, i32
  }
  func.func @transform_3(%arg0: i32) -> (i32, i32) {
    %c0_i32 = arith.constant 0 : i32
    %c0_i32_0 = arith.constant 0 : i32
    return %arg0, %c0_i32 : i32, i32
  }
}

</mosaic_0001>

<llo_original>
// kernel: tpu_custom_call.1
$region0: #{tpu_custom_call.1}
  #allocation0 [shape = 'u32[]', space=smem, size = 0x4, offset = 0x4, fixed_abs, tag = 'smem constant byte address 0x4 - core index']
  #allocation1 [shape = 'u32[144,128]{1,0:T(1,128)}', space=vmem, size = 0x12000, scoped, tag = 'internal scratch']
  %s0 = inlined_call_operand.vmem [shape: f32[8,24], index: 0, kind: input, shape index: {}]
  %s1 = inlined_call_operand.vmem [shape: f32[8,8], index: 1, kind: input, shape index: {}]
  %s2 = inlined_call_operand.vmem [shape: f32[184,64], index: 2, kind: input, shape index: {}]
  %s3 = inlined_call_operand.vmem [shape: f32[8,2], index: 3, kind: output, shape index: {}]
  %s4 = sld [smem:[#allocation0]]
  $region22: #{tpu_custom_call.1} parent=0
    _
  %s6 = ssub.s32 1, %s4
  %s7 = scalar_select 0, %s6, %s4
  // Predicated region
  $region2: #{tpu_custom_call.1} parent=0 // pred_check
    _
  $region3: #{tpu_custom_call.1} parent=0 // pred_check_branch
    %9 = sbr.rel (0) target = $region5
  $region4: #{tpu_custom_call.1} parent=0 // pred_region
    _
  $region5: #{tpu_custom_call.1} parent=0 // pred_fallthru
    _
  // Predicated region
  $region6: #{tpu_custom_call.1} parent=0 // pred_check
    _
  $region7: #{tpu_custom_call.1} parent=0 // pred_check_branch
    %11 = sbr.rel (0) target = $region9
  $region8: #{tpu_custom_call.1} parent=0 // pred_region
    _
  $region9: #{tpu_custom_call.1} parent=0 // pred_fallthru
    _
  // Predicated region
  $region10: #{tpu_custom_call.1} parent=0 // pred_check
    _
  $region11: #{tpu_custom_call.1} parent=0 // pred_check_branch
    %13 = sbr.rel (0) target = $region13
  $region12: #{tpu_custom_call.1} parent=0 // pred_region
    _
  $region13: #{tpu_custom_call.1} parent=0 // pred_fallthru
    _
  %v14 = vld [vmem:[%s0] sm:$0xff]
  %v15 = vld [vmem:[%s1] sm:$0xff]
  %v16 = vld [vmem:[%s2] sm:$0xff]
  %v17 = vld [vmem:[%s2 + $0x8] sm:$0xff]
  %v18 = vld [vmem:[%s2 + $0x10] sm:$0xff]
  %v19 = vld [vmem:[%s2 + $0x18] sm:$0xff]
  %vm20 = vcmask 64512
  %v22 = vsel %vm20, %v15, 0
  %24 = vmatprep.subr.mxu0 0.0
  %25 = vmatpush1.msra.mxu0 %v19
  %26 = vmatprep.subr.mxu0 0.0
  %27 = vmatpush1.msra.mxu0 0.0
  %28 = vmatprep.subr.mxu0 0.0
  %29 = vmatpush1.msra.mxu0 0.0
  %30 = vmatprep.subr.mxu0 0.0
  %31 = vmatpush1.msra.mxu0 0.0
  %32 = vmatprep.subr.mxu0 0.0
  %33 = vmatpush1.msra.mxu0 0.0
  %34 = vmatprep.subr.mxu0 0.0
  %35 = vmatpush1.msra.mxu0 0.0
  %36 = vmatprep.subr.mxu0 0.0
  %37 = vmatpush1.msra.mxu0 0.0
  %38 = vmatprep.subr.mxu0 0.0
  %39 = vmatpush1.msra.mxu0 0.0
  %40 = vmatprep.subr.mxu0 0.0
  %41 = vmatpush1.msra.mxu0 0.0
  %42 = vmatprep.subr.mxu0 0.0
  %43 = vmatpush1.msra.mxu0 0.0
  %44 = vmatprep.subr.mxu0 0.0
  %45 = vmatpush1.msra.mxu0 0.0
  %46 = vmatprep.subr.mxu0 0.0
  %47 = vmatpush1.msra.mxu0 0.0
  %48 = vmatprep.subr.mxu0 0.0
  %49 = vmatpush1.msra.mxu0 0.0
  %50 = vmatprep.subr.mxu0 0.0
  %51 = vmatpush1.msra.mxu0 0.0
  %52 = vmatprep.subr.mxu0 0.0
  %53 = vmatpush1.msra.mxu0 0.0
  %54 = vmatprep.subr.mxu0 0.0
  %55 = vmatpush1.msra.mxu0 0.0
  %56 = vmatprep.subr.mxu0 0.0
  %57 = vmatpush1.msra.mxu0 0.0
  %58 = vmatprep.subr.mxu0 0.0
  %59 = vmatpush1.msra.mxu0 0.0
  %60 = vmatprep.subr.mxu0 0.0
  %61 = vmatpush1.msra.mxu0 0.0
  %62 = vmatprep.subr.mxu0 0.0
  %63 = vmatpush1.msra.mxu0 0.0
  %64 = vmatprep.subr.mxu0 0.0
  %65 = vmatpush1.msra.mxu0 0.0
  %66 = vmatprep.subr.mxu0 0.0
  %67 = vmatpush1.msra.mxu0 0.0
  %68 = vmatprep.subr.mxu0 0.0
  %69 = vmatpush1.msra.mxu0 0.0
  %70 = vmatprep.subr.mxu0 0.0
  %71 = vmatpush1.msra.mxu0 0.0
  %72 = vmatprep.subr.mxu0 0.0
  %73 = vmatpush1.msra.mxu0 0.0
  %74 = vmatprep.subr.mxu0 0.0
  %75 = vmatpush1.msra.mxu0 0.0
  %76 = vmatprep.subr.mxu0 0.0
  %77 = vmatpush1.msra.mxu0 0.0
  %78 = vmatprep.subr.mxu0 0.0
  %79 = vmatpush1.msra.mxu0 0.0
  %80 = vmatprep.subr.mxu0 0.0
  %81 = vmatpush1.msra.mxu0 0.0
  %82 = vmatprep.subr.mxu0 0.0
  %83 = vmatpush1.msra.mxu0 0.0
  %84 = vmatprep.subr.mxu0 0.0
  %85 = vmatpush1.msra.mxu0 0.0
  %86 = vmatprep.subr.mxu0 0.0
  %87 = vmatpush1.msra.mxu0 0.0
  %88 = vmatprep.mubr.f32.mxu0 0.0
  %89 = vmatmul.mubr.f32.gmra.mrb[0].mxu0 %v22
  %v90 = vpop.f32.mrb[0].mxu0
  %v91 = vadd.f32 0.0, %v90
  %v92 = vpop.f32.mrb[0].mxu0
  %93 = vdwg.mxu0
  %vm94 = vcmask 195584
  %v96 = vsel %vm94, %v14, 0
  %98 = vmatprep.subr.mxu0 0.0
  %99 = vmatpush1.msra.mxu0 %v16
  %100 = vmatprep.subr.mxu0 0.0
  %101 = vmatpush1.msra.mxu0 %v17
  %102 = vmatprep.subr.mxu0 0.0
  %103 = vmatpush1.msra.mxu0 %v18
  %104 = vmatprep.subr.mxu0 0.0
  %105 = vmatpush1.msra.mxu0 0.0
  %106 = vmatprep.subr.mxu0 0.0
  %107 = vmatpush1.msra.mxu0 0.0
  %108 = vmatprep.subr.mxu0 0.0
  %109 = vmatpush1.msra.mxu0 0.0
  %110 = vmatprep.subr.mxu0 0.0
  %111 = vmatpush1.msra.mxu0 0.0
  %112 = vmatprep.subr.mxu0 0.0
  %113 = vmatpush1.msra.mxu0 0.0
  %114 = vmatprep.subr.mxu0 0.0
  %115 = vmatpush1.msra.mxu0 0.0
  %116 = vmatprep.subr.mxu0 0.0
  %117 = vmatpush1.msra.mxu0 0.0
  %118 = vmatprep.subr.mxu0 0.0
  %119 = vmatpush1.msra.mxu0 0.0
  %120 = vmatprep.subr.mxu0 0.0
  %121 = vmatpush1.msra.mxu0 0.0
  %122 = vmatprep.subr.mxu0 0.0
  %123 = vmatpush1.msra.mxu0 0.0
  %124 = vmatprep.subr.mxu0 0.0
  %125 = vmatpush1.msra.mxu0 0.0
  %126 = vmatprep.subr.mxu0 0.0
  %127 = vmatpush1.msra.mxu0 0.0
  %128 = vmatprep.subr.mxu0 0.0
  %129 = vmatpush1.msra.mxu0 0.0
  %130 = vmatprep.subr.mxu0 0.0
  %131 = vmatpush1.msra.mxu0 0.0
  %132 = vmatprep.subr.mxu0 0.0
  %133 = vmatpush1.msra.mxu0 0.0
  %134 = vmatprep.subr.mxu0 0.0
  %135 = vmatpush1.msra.mxu0 0.0
  %136 = vmatprep.subr.mxu0 0.0
  %137 = vmatpush1.msra.mxu0 0.0
  %138 = vmatprep.subr.mxu0 0.0
  %139 = vmatpush1.msra.mxu0 0.0
  %140 = vmatprep.subr.mxu0 0.0
  %141 = vmatpush1.msra.mxu0 0.0
  %142 = vmatprep.subr.mxu0 0.0
  %143 = vmatpush1.msra.mxu0 0.0
  %144 = vmatprep.subr.mxu0 0.0
  %145 = vmatpush1.msra.mxu0 0.0
  %146 = vmatprep.subr.mxu0 0.0
  %147 = vmatpush1.msra.mxu0 0.0
  %148 = vmatprep.subr.mxu0 0.0
  %149 = vmatpush1.msra.mxu0 0.0
  %150 = vmatprep.subr.mxu0 0.0
  %151 = vmatpush1.msra.mxu0 0.0
  %152 = vmatprep.subr.mxu0 0.0
  %153 = vmatpush1.msra.mxu0 0.0
  %154 = vmatprep.subr.mxu0 0.0
  %155 = vmatpush1.msra.mxu0 0.0
  %156 = vmatprep.subr.mxu0 0.0
  %157 = vmatpush1.msra.mxu0 0.0
  %158 = vmatprep.subr.mxu0 0.0
  %159 = vmatpush1.msra.mxu0 0.0
  %160 = vmatprep.subr.mxu0 0.0
  %161 = vmatpush1.msra.mxu0 0.0
  %162 = vmatprep.mubr.f32.mxu0 0.0
  %163 = vmatmul.mubr.f32.gmra.mrb[0].mxu0 %v96
  %v164 = vpop.f32.mrb[0].mxu0
  %v165 = vadd.f32 %v91, %v164
  %v166 = vpop.f32.mrb[0].mxu0
  %167 = vdwg.mxu0
  %v168 = vld [vmem:[%s2 + $0xa0] sm:$0x1]
  %v169 = vlaneseq
  %v170 = vshrl.u32 %v169, 7
  %v171 = vsub.s32 0, %v170
  %v172 = vrot.slane %v168, %v171
  %v173 = vadd.f32 %v165, %v172
  %v174 = vmax.f32 %v173, 0.0
  %v175 = vld [vmem:[%s2 + $0x20] sm:$0xff]
  %v176 = vld [vmem:[%s2 + $0x28] sm:$0xff]
  %v177 = vld [vmem:[%s2 + $0x30] sm:$0xff]
  %v178 = vld [vmem:[%s2 + $0x38] sm:$0xff]
  %v179 = vld [vmem:[%s2 + $0x40] sm:$0xff]
  %v180 = vld [vmem:[%s2 + $0x48] sm:$0xff]
  %v181 = vld [vmem:[%s2 + $0x50] sm:$0xff]
  %v182 = vld [vmem:[%s2 + $0x58] sm:$0xff]
  %v183 = vld [vmem:[%s2 + $0xa8] sm:$0x1]
  %v184 = vlaneseq
  %v185 = vshrl.u32 %v184, 7
  %v186 = vsub.s32 0, %v185
  %v187 = vrot.slane %v183, %v186
  %vm188 = vcmask 523264
  %v190 = vsel %vm188, %v174, 0
  %192 = vmatprep.subr.mxu0 0.0
  %193 = vmatpush1.msra.mxu0 %v175
  %194 = vmatprep.subr.mxu0 0.0
  %195 = vmatpush1.msra.mxu0 %v176
  %196 = vmatprep.subr.mxu0 0.0
  %197 = vmatpush1.msra.mxu0 %v177
  %198 = vmatprep.subr.mxu0 0.0
  %199 = vmatpush1.msra.mxu0 %v178
  %200 = vmatprep.subr.mxu0 0.0
  %201 = vmatpush1.msra.mxu0 %v179
  %202 = vmatprep.subr.mxu0 0.0
  %203 = vmatpush1.msra.mxu0 %v180
  %204 = vmatprep.subr.mxu0 0.0
  %205 = vmatpush1.msra.mxu0 %v181
  %206 = vmatprep.subr.mxu0 0.0
  %207 = vmatpush1.msra.mxu0 %v182
  %208 = vmatprep.subr.mxu0 0.0
  %209 = vmatpush1.msra.mxu0 0.0
  %210 = vmatprep.subr.mxu0 0.0
  %211 = vmatpush1.msra.mxu0 0.0
  %212 = vmatprep.subr.mxu0 0.0
  %213 = vmatpush1.msra.mxu0 0.0
  %214 = vmatprep.subr.mxu0 0.0
  %215 = vmatpush1.msra.mxu0 0.0
  %216 = vmatprep.subr.mxu0 0.0
  %217 = vmatpush1.msra.mxu0 0.0
  %218 = vmatprep.subr.mxu0 0.0
  %219 = vmatpush1.msra.mxu0 0.0
  %220 = vmatprep.subr.mxu0 0.0
  %221 = vmatpush1.msra.mxu0 0.0
  %222 = vmatprep.subr.mxu0 0.0
  %223 = vmatpush1.msra.mxu0 0.0
  %224 = vmatprep.subr.mxu0 0.0
  %225 = vmatpush1.msra.mxu0 0.0
  %226 = vmatprep.subr.mxu0 0.0
  %227 = vmatpush1.msra.mxu0 0.0
  %228 = vmatprep.subr.mxu0 0.0
  %229 = vmatpush1.msra.mxu0 0.0
  %230 = vmatprep.subr.mxu0 0.0
  %231 = vmatpush1.msra.mxu0 0.0
  %232 = vmatprep.subr.mxu0 0.0
  %233 = vmatpush1.msra.mxu0 0.0
  %234 = vmatprep.subr.mxu0 0.0
  %235 = vmatpush1.msra.mxu0 0.0
  %236 = vmatprep.subr.mxu0 0.0
  %237 = vmatpush1.msra.mxu0 0.0
  %238 = vmatprep.subr.mxu0 0.0
  %239 = vmatpush1.msra.mxu0 0.0
  %240 = vmatprep.subr.mxu0 0.0
  %241 = vmatpush1.msra.mxu0 0.0
  %242 = vmatprep.subr.mxu0 0.0
  %243 = vmatpush1.msra.mxu0 0.0
  %244 = vmatprep.subr.mxu0 0.0
  %245 = vmatpush1.msra.mxu0 0.0
  %246 = vmatprep.subr.mxu0 0.0
  %247 = vmatpush1.msra.mxu0 0.0
  %248 = vmatprep.subr.mxu0 0.0
  %249 = vmatpush1.msra.mxu0 0.0
  %250 = vmatprep.subr.mxu0 0.0
  %251 = vmatpush1.msra.mxu0 0.0
  %252 = vmatprep.subr.mxu0 0.0
  %253 = vmatpush1.msra.mxu0 0.0
  %254 = vmatprep.subr.mxu0 0.0
  %255 = vmatpush1.msra.mxu0 0.0
  %256 = vmatprep.mubr.f32.mxu0 0.0
  %257 = vmatmul.mubr.f32.gmra.mrb[0].mxu0 %v190
  %v258 = vpop.f32.mrb[0].mxu0
  %v259 = vadd.f32 %v187, %v258
  %v260 = vpop.f32.mrb[0].mxu0
  %261 = vdwg.mxu0
  %v262 = vmax.f32 %v259, 0.0
  %v263 = vld [vmem:[%s2 + $0x60] sm:$0xff]
  %v264 = vld [vmem:[%s2 + $0x68] sm:$0xff]
  %v265 = vld [vmem:[%s2 + $0x70] sm:$0xff]
  %v266 = vld [vmem:[%s2 + $0x78] sm:$0xff]
  %v267 = vld [vmem:[%s2 + $0x80] sm:$0xff]
  %v268 = vld [vmem:[%s2 + $0x88] sm:$0xff]
  %v269 = vld [vmem:[%s2 + $0x90] sm:$0xff]
  %v270 = vld [vmem:[%s2 + $0x98] sm:$0xff]
  %v271 = vld [vmem:[%s2 + $0xb0] sm:$0x1]
  %v272 = vlaneseq
  %v273 = vshrl.u32 %v272, 7
  %v274 = vsub.s32 0, %v273
  %v275 = vrot.slane %v271, %v274
  %v277 = vsel %vm188, %v262, 0
  %279 = vmatprep.subr.mxu0 0.0
  %280 = vmatpush1.msra.mxu0 %v263
  %281 = vmatprep.subr.mxu0 0.0
  %282 = vmatpush1.msra.mxu0 %v264
  %283 = vmatprep.subr.mxu0 0.0
  %284 = vmatpush1.msra.mxu0 %v265
  %285 = vmatprep.subr.mxu0 0.0
  %286 = vmatpush1.msra.mxu0 %v266
  %287 = vmatprep.subr.mxu0 0.0
  %288 = vmatpush1.msra.mxu0 %v267
  %289 = vmatprep.subr.mxu0 0.0
  %290 = vmatpush1.msra.mxu0 %v268
  %291 = vmatprep.subr.mxu0 0.0
  %292 = vmatpush1.msra.mxu0 %v269
  %293 = vmatprep.subr.mxu0 0.0
  %294 = vmatpush1.msra.mxu0 %v270
  %295 = vmatprep.subr.mxu0 0.0
  %296 = vmatpush1.msra.mxu0 0.0
  %297 = vmatprep.subr.mxu0 0.0
  %298 = vmatpush1.msra.mxu0 0.0
  %299 = vmatprep.subr.mxu0 0.0
  %300 = vmatpush1.msra.mxu0 0.0
  %301 = vmatprep.subr.mxu0 0.0
  %302 = vmatpush1.msra.mxu0 0.0
  %303 = vmatprep.subr.mxu0 0.0
  %304 = vmatpush1.msra.mxu0 0.0
  %305 = vmatprep.subr.mxu0 0.0
  %306 = vmatpush1.msra.mxu0 0.0
  %307 = vmatprep.subr.mxu0 0.0
  %308 = vmatpush1.msra.mxu0 0.0
  %309 = vmatprep.subr.mxu0 0.0
  %310 = vmatpush1.msra.mxu0 0.0
  %311 = vmatprep.subr.mxu0 0.0
  %312 = vmatpush1.msra.mxu0 0.0
  %313 = vmatprep.subr.mxu0 0.0
  %314 = vmatpush1.msra.mxu0 0.0
  %315 = vmatprep.subr.mxu0 0.0
  %316 = vmatpush1.msra.mxu0 0.0
  %317 = vmatprep.subr.mxu0 0.0
  %318 = vmatpush1.msra.mxu0 0.0
  %319 = vmatprep.subr.mxu0 0.0
  %320 = vmatpush1.msra.mxu0 0.0
  %321 = vmatprep.subr.mxu0 0.0
  %322 = vmatpush1.msra.mxu0 0.0
  %323 = vmatprep.subr.mxu0 0.0
  %324 = vmatpush1.msra.mxu0 0.0
  %325 = vmatprep.subr.mxu0 0.0
  %326 = vmatpush1.msra.mxu0 0.0
  %327 = vmatprep.subr.mxu0 0.0
  %328 = vmatpush1.msra.mxu0 0.0
  %329 = vmatprep.subr.mxu0 0.0
  %330 = vmatpush1.msra.mxu0 0.0
  %331 = vmatprep.subr.mxu0 0.0
  %332 = vmatpush1.msra.mxu0 0.0
  %333 = vmatprep.subr.mxu0 0.0
  %334 = vmatpush1.msra.mxu0 0.0
  %335 = vmatprep.subr.mxu0 0.0
  %336 = vmatpush1.msra.mxu0 0.0
  %337 = vmatprep.subr.mxu0 0.0
  %338 = vmatpush1.msra.mxu0 0.0
  %339 = vmatprep.subr.mxu0 0.0
  %340 = vmatpush1.msra.mxu0 0.0
  %341 = vmatprep.subr.mxu0 0.0
  %342 = vmatpush1.msra.mxu0 0.0
  %343 = vmatprep.mubr.f32.mxu0 0.0
  %344 = vmatmul.mubr.f32.gmra.mrb[0].mxu0 %v277
  %v345 = vpop.f32.mrb[0].mxu0
  %v346 = vadd.f32 %v275, %v345
  %v347 = vpop.f32.mrb[0].mxu0
  %348 = vdwg.mxu0
  %vm349 = vcmask 15360
  %350 = vst.msk [vmem:[%s3] sm:$0xff] %vm349, %v346
  // Predicated region
  $region14: #{tpu_custom_call.1} parent=0 // pred_check
    _
  $region15: #{tpu_custom_call.1} parent=0 // pred_check_branch
    %352 = sbr.rel (0) target = $region17
  $region16: #{tpu_custom_call.1} parent=0 // pred_region
    _
  $region17: #{tpu_custom_call.1} parent=0 // pred_fallthru
    _
  // Predicated region
  $region18: #{tpu_custom_call.1} parent=0 // pred_check
    _
  $region19: #{tpu_custom_call.1} parent=0 // pred_check_branch
    %354 = sbr.rel (0) target = $region21
  $region20: #{tpu_custom_call.1} parent=0 // pred_region
    _
  $region21: #{tpu_custom_call.1} parent=0 // pred_fallthru
    _

</llo_original>
